<compile_context>
chip_gen: v5e
topology: v5e:2x2
jax: 0.10.0
libtpu: 0.0.40
codegen_flags: <defaults>
</compile_context>

<pallas_src>
import jax
import jax.numpy as jnp
from jax.experimental import pallas as pl
from jax.experimental.pallas import tpu as pltpu

IN_F, H1, H2, NC = 68, 64, 32, 4
PAD = 128       # lane-aligned feature width for every layer
BIAS_ROW = 64   # biases stored at slab[2, BIAS_ROW + i, :]; those rows are
                # multiplied by h2 lanes 64..66, which are exactly zero.


def ffnn_kernel(x_ref, w_ref, out_ref):
    # x: (B, 128) f32, zero-padded past column IN_F-1.
    x = x_ref[...]

    b1 = w_ref[2, BIAS_ROW + 0:BIAS_ROW + 1, :]     # (1, 128)
    b2 = w_ref[2, BIAS_ROW + 1:BIAS_ROW + 2, :]
    b3 = w_ref[2, BIAS_ROW + 2:BIAS_ROW + 3, :]

    # ff1 + relu, ff2 + relu, out.  Zero padding stays zero through each
    # stage; the bias rows parked in block 2 meet exact-zero h2 lanes, so the
    # three dots are numerically identical to dots against pure-W blocks.
    h1 = jnp.maximum(
        jnp.dot(x, w_ref[0], preferred_element_type=jnp.float32) + b1, 0.0)
    h2 = jnp.maximum(
        jnp.dot(h1, w_ref[1], preferred_element_type=jnp.float32) + b2, 0.0)
    logits = jnp.dot(h2, w_ref[2], preferred_element_type=jnp.float32) + b3  # (B, 128)

    # softmax(dim=0) omitted: monotone per column, batch-argmax unchanged.

    # torch.max(., dim=0): first index of the maximal value along the batch.
    # Reduce over axis 0 directly (no transpose of the logits slab).
    bsz = logits.shape[0]
    col_max = jnp.max(logits, axis=0, keepdims=True)                  # (1, 128)
    sub_iota = jax.lax.broadcasted_iota(jnp.int32, logits.shape, 0)   # (B, 128)
    cand = jnp.where(logits == col_max, sub_iota, bsz)
    pred = jnp.min(cand, axis=0, keepdims=True)                       # (1, 128)

    # Single tiny lane->sublane move: pred row -> pred column, then build the
    # (4, 4) one-hot in its final orientation: out[c, k] = (k == pred[c]).
    pred_col = pred.T[:NC, :]                                         # (4, 1)
    k_idx = jax.lax.broadcasted_iota(jnp.int32, (NC, NC), 1)          # (4, 4)
    out_ref[...] = (k_idx == pred_col).astype(jnp.int32)


def init_params(key):
    """Deterministic init mimicking nn.Linear default (uniform +-1/sqrt(fan_in)),
    packed into one zero-padded (3, 128, 128) f32 slab.
      slab[i, :fan_in, :fan_out] = W_i  (stored (in, out))
      slab[2, BIAS_ROW + i, :fan_out] = b_i   (unused sublanes of the W3 block)
    """
    dims = [(IN_F, H1), (H1, H2), (H2, NC)]
    slab = jnp.zeros((3, PAD, PAD), jnp.float32)
    for i, (fan_in, fan_out) in enumerate(dims):
        key, kw, kb = jax.random.split(key, 3)
        bound = float(fan_in) ** -0.5
        w = jax.random.uniform(kw, (fan_in, fan_out), jnp.float32, -bound, bound)
        b = jax.random.uniform(kb, (fan_out,), jnp.float32, -bound, bound)
        slab = slab.at[i, :fan_in, :fan_out].set(w)
        slab = slab.at[2, BIAS_ROW + i, :fan_out].set(b)
    return slab


@jax.jit
def ffnn_forward(x, slab):
    # Same implicit restriction as the torch code: one_hot(pred, 4) with
    # pred = argmax over batch requires batch <= 4.
    B, F = x.shape
    assert B <= NC and F == IN_F
    x_pad = jnp.pad(x.astype(jnp.float32), ((0, 0), (0, PAD - F)))
    return pl.pallas_call(
        ffnn_kernel,
        out_shape=jax.ShapeDtypeStruct((NC, NC), jnp.int32),
        in_specs=[pl.BlockSpec(memory_space=pltpu.MemorySpace.VMEM)] * 2,
        out_specs=pl.BlockSpec(memory_space=pltpu.MemorySpace.VMEM),
    )(x_pad, slab)


def ffnn_reference(x, slab):
    w1, b1 = slab[0, :IN_F, :H1], slab[2, BIAS_ROW + 0, :H1]
    w2, b2 = slab[1, :H1, :H2], slab[2, BIAS_ROW + 1, :H2]
    w3, b3 = slab[2, :H2, :NC], slab[2, BIAS_ROW + 2, :NC]
    h1 = jnp.maximum(x @ w1 + b1, 0.0)
    h2 = jnp.maximum(h1 @ w2 + b2, 0.0)
    logits = h2 @ w3 + b3
    sm = jax.nn.softmax(logits, axis=0)
    pred = jnp.argmax(sm, axis=0)                             # (4,)
    return jax.nn.one_hot(pred, NC, dtype=jnp.int32)          # (4, 4)


if __name__ == "__main__":
    key = jax.random.PRNGKey(0)
    kp, kx = jax.random.split(key)
    slab = init_params(kp)
    x = jax.random.normal(kx, (2, IN_F), jnp.float32)         # batch=2, features=68

    out = jax.block_until_ready(ffnn_forward(x, slab))
    ref = jax.block_until_ready(ffnn_reference(x, slab))

    assert out.shape == (NC, NC) and out.dtype == jnp.int32
    assert bool(jnp.all(out == ref))
    print("KERNEL_OK")
</pallas_src>

<mosaic_0001>
module attributes {stable_mosaic.version = 11 : i64} {
  func.func @ffnn_kernel(%arg0: memref<2x128xf32, #tpu.memory_space<vmem>>, %arg1: memref<3x128x128xf32, #tpu.memory_space<vmem>>, %arg2: memref<4x4xi32, #tpu.memory_space<vmem>>) attributes {dimension_semantics = [], scalar_prefetch = 0 : i64, scratch_operands = 0 : i64, tpu.core_type = #tpu.core_type<tc>} {
    %c0 = arith.constant 0 : index
    %c0_0 = arith.constant 0 : index
    %0 = vector.load %arg0[%c0, %c0_0] : memref<2x128xf32, #tpu.memory_space<vmem>>, vector<2x128xf32>
    %c2 = arith.constant 2 : index
    %c64 = arith.constant 64 : index
    %c0_1 = arith.constant 0 : index
    %1 = vector.load %arg1[%c2, %c64, %c0_1] : memref<3x128x128xf32, #tpu.memory_space<vmem>>, vector<1x1x128xf32>
    %2 = vector.shape_cast %1 : vector<1x1x128xf32> to vector<1x128xf32>
    %c2_2 = arith.constant 2 : index
    %c65 = arith.constant 65 : index
    %c0_3 = arith.constant 0 : index
    %3 = vector.load %arg1[%c2_2, %c65, %c0_3] : memref<3x128x128xf32, #tpu.memory_space<vmem>>, vector<1x1x128xf32>
    %4 = vector.shape_cast %3 : vector<1x1x128xf32> to vector<1x128xf32>
    %c2_4 = arith.constant 2 : index
    %c66 = arith.constant 66 : index
    %c0_5 = arith.constant 0 : index
    %5 = vector.load %arg1[%c2_4, %c66, %c0_5] : memref<3x128x128xf32, #tpu.memory_space<vmem>>, vector<1x1x128xf32>
    %6 = vector.shape_cast %5 : vector<1x1x128xf32> to vector<1x128xf32>
    %c0_6 = arith.constant 0 : index
    %c0_7 = arith.constant 0 : index
    %c0_8 = arith.constant 0 : index
    %7 = vector.load %arg1[%c0_6, %c0_7, %c0_8] : memref<3x128x128xf32, #tpu.memory_space<vmem>>, vector<1x128x128xf32>
    %8 = vector.shape_cast %7 : vector<1x128x128xf32> to vector<128x128xf32>
    %cst = arith.constant dense<0.000000e+00> : vector<2x128xf32>
    %9 = tpu.matmul %0, %8, %cst {dimension_numbers = #tpu.dot_dimension_numbers<[1], [0], [0], [1], [0, 0, 1, 1], [], []>} : vector<2x128xf32>, vector<128x128xf32>, vector<2x128xf32> -> vector<2x128xf32>
    %10 = vector.broadcast %2 : vector<1x128xf32> to vector<2x128xf32>
    %11 = arith.addf %9, %10 : vector<2x128xf32>
    %cst_9 = arith.constant 0.000000e+00 : f32
    %12 = vector.broadcast %cst_9 : f32 to vector<2x128xf32>
    %13 = arith.maximumf %11, %12 : vector<2x128xf32>
    %c1 = arith.constant 1 : index
    %c0_10 = arith.constant 0 : index
    %c0_11 = arith.constant 0 : index
    %14 = vector.load %arg1[%c1, %c0_10, %c0_11] : memref<3x128x128xf32, #tpu.memory_space<vmem>>, vector<1x128x128xf32>
    %15 = vector.shape_cast %14 : vector<1x128x128xf32> to vector<128x128xf32>
    %cst_12 = arith.constant dense<0.000000e+00> : vector<2x128xf32>
    %16 = tpu.matmul %13, %15, %cst_12 {dimension_numbers = #tpu.dot_dimension_numbers<[1], [0], [0], [1], [0, 0, 1, 1], [], []>} : vector<2x128xf32>, vector<128x128xf32>, vector<2x128xf32> -> vector<2x128xf32>
    %17 = vector.broadcast %4 : vector<1x128xf32> to vector<2x128xf32>
    %18 = arith.addf %16, %17 : vector<2x128xf32>
    %cst_13 = arith.constant 0.000000e+00 : f32
    %19 = vector.broadcast %cst_13 : f32 to vector<2x128xf32>
    %20 = arith.maximumf %18, %19 : vector<2x128xf32>
    %c2_14 = arith.constant 2 : index
    %c0_15 = arith.constant 0 : index
    %c0_16 = arith.constant 0 : index
    %21 = vector.load %arg1[%c2_14, %c0_15, %c0_16] : memref<3x128x128xf32, #tpu.memory_space<vmem>>, vector<1x128x128xf32>
    %22 = vector.shape_cast %21 : vector<1x128x128xf32> to vector<128x128xf32>
    %cst_17 = arith.constant dense<0.000000e+00> : vector<2x128xf32>
    %23 = tpu.matmul %20, %22, %cst_17 {dimension_numbers = #tpu.dot_dimension_numbers<[1], [0], [0], [1], [0, 0, 1, 1], [], []>} : vector<2x128xf32>, vector<128x128xf32>, vector<2x128xf32> -> vector<2x128xf32>
    %24 = vector.broadcast %6 : vector<1x128xf32> to vector<2x128xf32>
    %25 = arith.addf %23, %24 : vector<2x128xf32>
    %cst_18 = arith.constant dense<0xFF800000> : vector<128xf32>
    %26 = vector.multi_reduction <maximumf>, %25, %cst_18 [0] : vector<2x128xf32> to vector<128xf32>
    %27 = vector.shape_cast %26 : vector<128xf32> to vector<1x128xf32>
    %28 = tpu.iota {dimensions = array<i32: 0>} : vector<2x128xi32>
    %29 = vector.broadcast %27 : vector<1x128xf32> to vector<2x128xf32>
    %30 = arith.cmpf oeq, %25, %29 : vector<2x128xf32>
    %c2_i32 = arith.constant 2 : i32
    %31 = vector.broadcast %c2_i32 : i32 to vector<2x128xi32>
    %32 = arith.select %30, %28, %31 : vector<2x128xi1>, vector<2x128xi32>
    %cst_19 = arith.constant dense<2147483647> : vector<128xi32>
    %33 = vector.multi_reduction <minsi>, %32, %cst_19 [0] : vector<2x128xi32> to vector<128xi32>
    %34 = vector.shape_cast %33 : vector<128xi32> to vector<1x128xi32>
    %35 = tpu.transpose %34, [1, 0] : vector<1x128xi32> -> vector<128x1xi32>
    %36 = vector.extract_strided_slice %35 {offsets = [0, 0], sizes = [4, 1], strides = [1, 1]} : vector<128x1xi32> to vector<4x1xi32>
    %37 = tpu.iota {dimensions = array<i32: 1>} : vector<4x4xi32>
    %38 = vector.broadcast %36 : vector<4x1xi32> to vector<4x4xi32>
    %39 = arith.cmpi eq, %37, %38 : vector<4x4xi32>
    %40 = arith.extui %39 : vector<4x4xi1> to vector<4x4xi32>
    %c0_20 = arith.constant 0 : index
    %c0_21 = arith.constant 0 : index
    %41 = vector.load %arg2[%c0_20, %c0_21] : memref<4x4xi32, #tpu.memory_space<vmem>>, vector<4x4xi32>
    tpu.vector_store %arg2[%c0_20, %c0_21], %40 {strides = array<i32>} : memref<4x4xi32, #tpu.memory_space<vmem>>, vector<4x4xi32>,
    return
  }
}

</mosaic_0001>

<llo_original>
// kernel: ffnn_forward.1
$region0: #{ffnn_forward.1}
  #allocation0 [shape = 'u32[]', space=smem, size = 0x4, offset = 0x4, fixed_abs, tag = 'smem constant byte address 0x4 - core index']
  #allocation1 [shape = 'u32[72,128]{1,0:T(1,128)}', space=vmem, size = 0x9000, scoped, tag = 'internal scratch']
  %s0 = inlined_call_operand.vmem [shape: f32[2,128], index: 0, kind: input, shape index: {}]
  %s1 = inlined_call_operand.hbm [shape: f32[3,128,128], index: 1, kind: input, shape index: {}]
  %s2 = inlined_call_operand.hbm [shape: s32[4,4], index: 2, kind: output, shape index: {}]
  %s3 = sld [smem:[#allocation0]]
  $region22: #{ffnn_forward.1} parent=0
    _
  %s5 = ssub.s32 1, %s3
  %s6 = scalar_select 0, %s5, %s3
  $region1: #{ffnn_forward.1} parent=0
    #allocation2 [shape = 'u8[196608]{0}', space=vmem, size = 0x30000, scoped, tag = 'input window, operand 1, single buffered']
    #allocation3 [shape = 's32[1]{0}', space=sflag, size = 0x4, scoped, tag = 'scoped memory for ffnn_forward.1']
    #allocation4 [shape = 's32[1]{0}', space=sflag, size = 0x4, scoped, tag = 'scoped memory for ffnn_forward.1']
    #allocation5 [shape = 'u8[2048]{0}', space=vmem, size = 0x800, scoped, tag = 'output window, operand 0, single buffered']
    %7 = vsyncpa [#allocation3], 0
    %8 = vsyncpa [#allocation4], 0
    // Predicated region
    $region2: #{ffnn_forward.1} parent=1 // pred_check
      _
    $region3: #{ffnn_forward.1} parent=1 // pred_check_branch
      %10 = sbr.rel (0) target = $region5
    $region4: #{ffnn_forward.1} parent=1 // pred_region
      _
    $region5: #{ffnn_forward.1} parent=1 // pred_fallthru
      _
    // Predicated region
    $region6: #{ffnn_forward.1} parent=1 // pred_check
      _
    $region7: #{ffnn_forward.1} parent=1 // pred_check_branch
      %12 = sbr.rel (0) target = $region9
    $region8: #{ffnn_forward.1} parent=1 // pred_region
      %14 = vsyncadd [#allocation3], 0
      %s15 = sshll.u32 %s1, 4
      %s16 = int_to_ptr.hbm [resolvable:$true] %s15
      %s17 = sshll.u32 [#allocation2], 4
      %s18 = int_to_ptr.vmem [resolvable:$true] %s17
      %23 = dma.hbm_to_vmem [thread:$0]  %s16, 6144, %s18, [#allocation3], 128, 128, 8
    $region9: #{ffnn_forward.1} parent=1 // pred_fallthru
      _
    // Predicated region
    $region10: #{ffnn_forward.1} parent=1 // pred_check
      _
    $region11: #{ffnn_forward.1} parent=1 // pred_check_branch
      %25 = sbr.rel (0) target = $region13
    $region12: #{ffnn_forward.1} parent=1 // pred_region
      %27 = dma.done [#allocation3], 6144
    $region13: #{ffnn_forward.1} parent=1 // pred_fallthru
      _
    %v28 = vld [vmem:[%s0] sm:$0x3]
    %s29 = scalar_lea.vmem [#allocation2], 256
    %v30 = vld [vmem:[%s29 + $0x40] sm:$0x1]
    %v31 = vld [vmem:[%s29 + $0x41] sm:$0x1]
    %v32 = vld [vmem:[%s29 + $0x42] sm:$0x1]
    %v33 = vld [vmem:[#allocation2] sm:$0xff]
    %v34 = vld [vmem:[#allocation2 + $0x8] sm:$0xff]
    %v35 = vld [vmem:[#allocation2 + $0x10] sm:$0xff]
    %v36 = vld [vmem:[#allocation2 + $0x18] sm:$0xff]
    %v37 = vld [vmem:[#allocation2 + $0x20] sm:$0xff]
    %v38 = vld [vmem:[#allocation2 + $0x28] sm:$0xff]
    %v39 = vld [vmem:[#allocation2 + $0x30] sm:$0xff]
    %v40 = vld [vmem:[#allocation2 + $0x38] sm:$0xff]
    %v41 = vld [vmem:[#allocation2 + $0x40] sm:$0xff]
    %v42 = vld [vmem:[#allocation2 + $0x48] sm:$0xff]
    %v43 = vld [vmem:[#allocation2 + $0x50] sm:$0xff]
    %v44 = vld [vmem:[#allocation2 + $0x58] sm:$0xff]
    %v45 = vld [vmem:[#allocation2 + $0x60] sm:$0xff]
    %v46 = vld [vmem:[#allocation2 + $0x68] sm:$0xff]
    %v47 = vld [vmem:[#allocation2 + $0x70] sm:$0xff]
    %v48 = vld [vmem:[#allocation2 + $0x78] sm:$0xff]
    %v49 = vperm.slane %v30, 0
    %50 = vmatpush.msra.mxu0 %v48
    %51 = vmatpush.msra.mxu0 %v47
    %52 = vmatpush.msra.mxu0 %v46
    %53 = vmatpush.msra.mxu0 %v45
    %54 = vmatpush.msra.mxu0 %v44
    %55 = vmatpush.msra.mxu0 %v43
    %56 = vmatpush.msra.mxu0 %v42
    %57 = vmatpush.msra.mxu0 %v41
    %58 = vmatpush.msra.mxu0 %v40
    %59 = vmatpush.msra.mxu0 %v39
    %60 = vmatpush.msra.mxu0 %v38
    %61 = vmatpush.msra.mxu0 %v37
    %62 = vmatpush.msra.mxu0 %v36
    %63 = vmatpush.msra.mxu0 %v35
    %64 = vmatpush.msra.mxu0 %v34
    %65 = vmatpush.msra.mxu0 %v33
    %66 = vmatmul.f32.gmra.mxu0 %v28
    %v67 = vpop.f32.mrf.mxu0
    %v68 = vadd.f32 %v49, %v67
    %69 = vdwg.mxu0
    %v70 = vmax.f32 %v68, 0.0
    %s71 = scalar_lea.vmem [#allocation2], 128
    %v72 = vld [vmem:[%s71] sm:$0xff]
    %v73 = vld [vmem:[%s71 + $0x8] sm:$0xff]
    %v74 = vld [vmem:[%s71 + $0x10] sm:$0xff]
    %v75 = vld [vmem:[%s71 + $0x18] sm:$0xff]
    %v76 = vld [vmem:[%s71 + $0x20] sm:$0xff]
    %v77 = vld [vmem:[%s71 + $0x28] sm:$0xff]
    %v78 = vld [vmem:[%s71 + $0x30] sm:$0xff]
    %v79 = vld [vmem:[%s71 + $0x38] sm:$0xff]
    %v80 = vld [vmem:[%s71 + $0x40] sm:$0xff]
    %v81 = vld [vmem:[%s71 + $0x48] sm:$0xff]
    %v82 = vld [vmem:[%s71 + $0x50] sm:$0xff]
    %v83 = vld [vmem:[%s71 + $0x58] sm:$0xff]
    %v84 = vld [vmem:[%s71 + $0x60] sm:$0xff]
    %v85 = vld [vmem:[%s71 + $0x68] sm:$0xff]
    %v86 = vld [vmem:[%s71 + $0x70] sm:$0xff]
    %v87 = vld [vmem:[%s71 + $0x78] sm:$0xff]
    %v88 = vperm.slane %v31, 0
    %89 = vmatpush.msra.mxu0 %v87
    %90 = vmatpush.msra.mxu0 %v86
    %91 = vmatpush.msra.mxu0 %v85
    %92 = vmatpush.msra.mxu0 %v84
    %93 = vmatpush.msra.mxu0 %v83
    %94 = vmatpush.msra.mxu0 %v82
    %95 = vmatpush.msra.mxu0 %v81
    %96 = vmatpush.msra.mxu0 %v80
    %97 = vmatpush.msra.mxu0 %v79
    %98 = vmatpush.msra.mxu0 %v78
    %99 = vmatpush.msra.mxu0 %v77
    %100 = vmatpush.msra.mxu0 %v76
    %101 = vmatpush.msra.mxu0 %v75
    %102 = vmatpush.msra.mxu0 %v74
    %103 = vmatpush.msra.mxu0 %v73
    %104 = vmatpush.msra.mxu0 %v72
    %105 = vmatmul.f32.gmra.mxu0 %v70
    %v106 = vpop.f32.mrf.mxu0
    %v107 = vadd.f32 %v88, %v106
    %108 = vdwg.mxu0
    %v109 = vmax.f32 %v107, 0.0
    %v110 = vld [vmem:[%s29] sm:$0xff]
    %v111 = vld [vmem:[%s29 + $0x8] sm:$0xff]
    %v112 = vld [vmem:[%s29 + $0x10] sm:$0xff]
    %v113 = vld [vmem:[%s29 + $0x18] sm:$0xff]
    %v114 = vld [vmem:[%s29 + $0x20] sm:$0xff]
    %v115 = vld [vmem:[%s29 + $0x28] sm:$0xff]
    %v116 = vld [vmem:[%s29 + $0x30] sm:$0xff]
    %v117 = vld [vmem:[%s29 + $0x38] sm:$0xff]
    %v118 = vld [vmem:[%s29 + $0x40] sm:$0xff]
    %v119 = vld [vmem:[%s29 + $0x48] sm:$0xff]
    %v120 = vld [vmem:[%s29 + $0x50] sm:$0xff]
    %v121 = vld [vmem:[%s29 + $0x58] sm:$0xff]
    %v122 = vld [vmem:[%s29 + $0x60] sm:$0xff]
    %v123 = vld [vmem:[%s29 + $0x68] sm:$0xff]
    %v124 = vld [vmem:[%s29 + $0x70] sm:$0xff]
    %v125 = vld [vmem:[%s29 + $0x78] sm:$0xff]
    %v126 = vperm.slane %v32, 0
    %127 = vmatpush.msra.mxu0 %v125
    %128 = vmatpush.msra.mxu0 %v124
    %129 = vmatpush.msra.mxu0 %v123
    %130 = vmatpush.msra.mxu0 %v122
    %131 = vmatpush.msra.mxu0 %v121
    %132 = vmatpush.msra.mxu0 %v120
    %133 = vmatpush.msra.mxu0 %v119
    %134 = vmatpush.msra.mxu0 %v118
    %135 = vmatpush.msra.mxu0 %v117
    %136 = vmatpush.msra.mxu0 %v116
    %137 = vmatpush.msra.mxu0 %v115
    %138 = vmatpush.msra.mxu0 %v114
    %139 = vmatpush.msra.mxu0 %v113
    %140 = vmatpush.msra.mxu0 %v112
    %141 = vmatpush.msra.mxu0 %v111
    %142 = vmatpush.msra.mxu0 %v110
    %143 = vmatmul.f32.gmra.mxu0 %v109
    %v144 = vpop.f32.mrf.mxu0
    %v145 = vadd.f32 %v126, %v144
    %146 = vdwg.mxu0
    %vm147 = vcmask 1041408
    %v148 = vsel %vm147, %v145, -inf
    %v149 = vrot.slane %v148, 4
    %v150 = vmax.f32 %v148, %v149
    %v151 = vrot.slane %v150, 2
    %v152 = vmax.f32 %v150, %v151
    %v153 = vrot.slane %v152, 1
    %v154 = vmax.f32 %v152, %v153
    %v155 = vlaneseq
    %v156 = vshrl.u32 %v155, 7
    %vm157 = vcmp.eq.f32.partialorder %v145, %v154
    %v158 = vsel %vm157, %v156, 2
    %v159 = vsel %vm147, %v158, 2147483647
    %v160 = vrot.slane %v159, 4
    %vm161 = vcmp.lt.s32.totalorder %v159, %v160
    %v162 = vsel %vm161, %v159, %v160
    %v163 = vrot.slane %v162, 2
    %vm164 = vcmp.lt.s32.totalorder %v162, %v163
    %v165 = vsel %vm164, %v162, %v163
    %v166 = vrot.slane %v165, 1
    %vm167 = vcmp.lt.s32.totalorder %v165, %v166
    %v168 = vsel %vm167, %v165, %v166
    %169 = vxpose.xlu0.b32.start [1/16] %v168, 128
    %170 = vxpose.xlu0.b32.cont [2/16] 0, 128
    %171 = vxpose.xlu0.b32.cont [3/16] 0, 128
    %172 = vxpose.xlu0.b32.cont [4/16] 0, 128
    %173 = vxpose.xlu0.b32.cont [5/16] 0, 128
    %174 = vxpose.xlu0.b32.cont [6/16] 0, 128
    %175 = vxpose.xlu0.b32.cont [7/16] 0, 128
    %176 = vxpose.xlu0.b32.cont [8/16] 0, 128
    %177 = vxpose.xlu0.b32.cont [9/16] 0, 128
    %178 = vxpose.xlu0.b32.cont [10/16] 0, 128
    %179 = vxpose.xlu0.b32.cont [11/16] 0, 128
    %180 = vxpose.xlu0.b32.cont [12/16] 0, 128
    %181 = vxpose.xlu0.b32.cont [13/16] 0, 128
    %182 = vxpose.xlu0.b32.cont [14/16] 0, 128
    %183 = vxpose.xlu0.b32.cont [15/16] 0, 128
    %184 = vxpose.xlu0.b32.end [16/16] 0, 128
    %v185 = vpop.trf.xlu0
    %v186 = vpop.trf.xlu0
    %v187 = vpop.trf.xlu0
    %v188 = vpop.trf.xlu0
    %v189 = vpop.trf.xlu0
    %v190 = vpop.trf.xlu0
    %v191 = vpop.trf.xlu0
    %v192 = vpop.trf.xlu0
    %v193 = vpop.trf.xlu0
    %v194 = vpop.trf.xlu0
    %v195 = vpop.trf.xlu0
    %v196 = vpop.trf.xlu0
    %v197 = vpop.trf.xlu0
    %v198 = vpop.trf.xlu0
    %v199 = vpop.trf.xlu0
    %v200 = vpop.trf.xlu0
    %v201 = vlaneseq
    %v202 = vand.u32 %v201, 127
    %203 = vset.pattern.permute.xlu0 0
    %204 = vperm.xlu0 %203, %v185
    %v205 = vpop.permute.xlu0 %204
    %vm206 = vcmp.eq.s32.totalorder %v202, %v205
    %v207 = vsel %vm206, 1, 0
    %vm208 = vcmask 27648
    %209 = vst.msk [vmem:[#allocation5] sm:$0xf] %vm208, %v207
    // Predicated region
    $region14: #{ffnn_forward.1} parent=1 // pred_check
      _
    $region15: #{ffnn_forward.1} parent=1 // pred_check_branch
      %211 = sbr.rel (0) target = $region17
    $region16: #{ffnn_forward.1} parent=1 // pred_region
      %213 = vsyncadd [#allocation4], 0
      %s215 = sshll.u32 [#allocation5], 4
      %s216 = int_to_ptr.vmem [resolvable:$true] %s215
      %s217 = sshll.u32 %s2, 4
      %s218 = int_to_ptr.hbm [resolvable:$true] %s217
      %220 = dma.vmem_to_hbm [thread:$0]  %s216, 64, %s218, [#allocation4]
    $region17: #{ffnn_forward.1} parent=1 // pred_fallthru
      _
    // Predicated region
    $region18: #{ffnn_forward.1} parent=1 // pred_check
      _
    $region19: #{ffnn_forward.1} parent=1 // pred_check_branch
      %222 = sbr.rel (0) target = $region21
    $region20: #{ffnn_forward.1} parent=1 // pred_region
      %224 = dma.done [#allocation4], 64
    $region21: #{ffnn_forward.1} parent=1 // pred_fallthru
      _
    %225 = vsyncpa [#allocation3], 1
    %226 = vsyncpa [#allocation4], 1

</llo_original>
